<compile_context>
chip_gen: v7x
topology: tpu7x:2x2x1
jax: 0.10.0
libtpu: 0.0.40
codegen_flags: <defaults>
</compile_context>

<pallas_src>
import functools

import jax
import jax.numpy as jnp
import numpy as np
from jax import lax
from jax.experimental import pallas as pl
from jax.experimental.pallas import tpu as pltpu


def _block_kernel(x_ref, w_ref, ss_ref, out_ref, col_ref, *, wp):
    """One (batch, row-tile) per grid step.

    x_ref   : (1, 1, C_in_p, L_flat)  bf16   row-flattened padded input tile
                                              (L_flat = (tile_h+2)*wp + 2)
    w_ref   : (C_out, 9*C_in_p)       bf16   conv taps, tap-major then channel
    ss_ref  : (1, 2, C_out, 1)        f32    [scale_eff ; shift_eff]
    out_ref : (1, 1, C_out, L_out)    f32    L_out = tile_h * wp (spatial on lanes)
    col_ref : (9*C_in_p, L_out)       bf16   VMEM im2col scratch
    """
    c_in = x_ref.shape[2]
    l_out = out_ref.shape[3]

    # Build the im2col operand once: each 3x3 tap is a pure flat-offset slice
    # of the row-flattened tile (lane shift only, no per-tap reshape).
    for ky in range(3):
        for kx in range(3):
            t = ky * 3 + kx
            off = ky * wp + kx                       # static python int
            col_ref[t * c_in:(t + 1) * c_in, :] = x_ref[0, 0, :, off:off + l_out]

    # Single fused matmul on the MXU: (C_out, 9*C_in) x (9*C_in, L_out),
    # bf16 operands, f32 accumulation.
    acc = jnp.dot(w_ref[...], col_ref[...],
                  preferred_element_type=jnp.float32)        # (C_out, L_out) f32

    # y = conv*(scale+1) + (shift + bias*(scale+1))  -- bias already folded in.
    scale_eff = ss_ref[0, 0]                                  # (C_out, 1) f32
    shift_eff = ss_ref[0, 1]                                  # (C_out, 1) f32
    y = acc * scale_eff + shift_eff

    # SiLU in f32 (v5e has no bf16 VPU/EUP).
    out_ref[0, 0] = (y * jax.nn.sigmoid(y)).astype(out_ref.dtype)


@functools.partial(jax.jit, static_argnames=("tile_h",))
def block_forward(x_nchw, weight_oihw, bias, scale_nc11=None, shift_nc11=None,
                  *, tile_h=None):
    """Block forward: y = SiLU(conv3x3(x) * (scale+1) + shift).

    x_nchw      : (N, C_in, H, W)      float32
    weight_oihw : (C_out, C_in, 3, 3)  float32 (PyTorch OIHW layout)
    bias        : (C_out,)
    scale_nc11  : (N, C_out, 1, 1) or None
    shift_nc11  : (N, C_out, 1, 1) or None
    returns     : (N, C_out, H, W)
    """
    N, C_in, H, W = x_nchw.shape
    C_out = weight_oihw.shape[0]

    if tile_h is None:
        tile_h = 8 if (H % 8 == 0 and H > 8) else H   # row tile (spatial grid axis)
    assert H % tile_h == 0
    T = H // tile_h
    Wp = W + 2                                        # padded row length (lanes)
    C_in_p = ((C_in + 7) // 8) * 8                    # sublane-aligned channels
    l_out = tile_h * Wp                               # outputs per tile (lane-dense)
    l_flat = (tile_h + 2) * Wp + 2                    # +2 tail slack for tap (2,2)
    cdtype = jnp.bfloat16                             # DMA / MXU dtype

    # ---- glue (single fused HBM pass; no NCHW<->NHWC transposes) ----
    xp = jnp.pad(x_nchw, ((0, 0), (0, C_in_p - C_in), (1, 1), (1, 1)))
    xp_flat = jnp.pad(xp.reshape(N, C_in_p, (H + 2) * Wp),
                      ((0, 0), (0, 0), (0, 2))).astype(cdtype)
    # halo'd row tiles (2 duplicated rows per tile keeps BlockSpecs non-overlapping)
    x_tiles = jnp.stack(
        [xp_flat[:, :, t * tile_h * Wp: t * tile_h * Wp + l_flat] for t in range(T)],
        axis=1)                                                   # (N,T,C_in_p,l_flat)

    # weights: OIHW -> (C_out, 9*C_in_p), tap-major then channel, bf16
    w_pad = jnp.pad(weight_oihw, ((0, 0), (0, C_in_p - C_in), (0, 0), (0, 0)))
    w2 = jnp.transpose(w_pad, (0, 2, 3, 1)).reshape(C_out, 9 * C_in_p).astype(cdtype)

    # fold conv bias into scale/shift; merge into one (N, 2, C_out, 1) side input
    if scale_nc11 is None:
        scale_nc11 = jnp.zeros((N, C_out, 1, 1), jnp.float32)
    if shift_nc11 is None:
        shift_nc11 = jnp.zeros((N, C_out, 1, 1), jnp.float32)
    s_eff = (scale_nc11.astype(jnp.float32) + 1.0)
    sh_eff = shift_nc11.astype(jnp.float32) + bias.reshape(1, C_out, 1, 1) * s_eff
    ss = jnp.concatenate([s_eff.reshape(N, 1, C_out, 1),
                          sh_eff.reshape(N, 1, C_out, 1)], axis=1)  # (N,2,C_out,1)

    kernel = functools.partial(_block_kernel, wp=Wp)
    out_flat = pl.pallas_call(
        kernel,
        out_shape=jax.ShapeDtypeStruct((N, T, C_out, l_out), x_nchw.dtype),
        grid_spec=pltpu.PrefetchScalarGridSpec(
            num_scalar_prefetch=0,
            grid=(N, T),
            in_specs=[
                pl.BlockSpec((1, 1, C_in_p, l_flat), lambda n, t: (n, t, 0, 0)),
                pl.BlockSpec((C_out, 9 * C_in_p), lambda n, t: (0, 0)),
                pl.BlockSpec((1, 2, C_out, 1), lambda n, t: (n, 0, 0, 0)),
            ],
            out_specs=pl.BlockSpec((1, 1, C_out, l_out), lambda n, t: (n, t, 0, 0)),
            scratch_shapes=[pltpu.VMEM((9 * C_in_p, l_out), cdtype)],
        ),
        compiler_params=pltpu.CompilerParams(
            dimension_semantics=("parallel", "parallel"),
            vmem_limit_bytes=32 * 1024 * 1024,
        ),
    )(x_tiles, w2, ss)

    # ---- glue: drop the 2 wrap-around columns per row, restore (N,C,H,W) ----
    out = out_flat.reshape(N, T, C_out, tile_h, Wp)
    out = jnp.transpose(out, (0, 2, 1, 3, 4)).reshape(N, C_out, H, Wp)
    return out[..., :W]


def _reference(x_nchw, weight_oihw, bias, scale_nc11, shift_nc11):
    """Plain-JAX reference matching PyTorch semantics (same bf16 quantization
    of conv inputs as the kernel so the comparison is apples-to-apples)."""
    xq = x_nchw.astype(jnp.bfloat16).astype(jnp.float32)
    wq = weight_oihw.astype(jnp.bfloat16).astype(jnp.float32)
    y = lax.conv_general_dilated(
        xq, wq, window_strides=(1, 1), padding=((1, 1), (1, 1)),
        dimension_numbers=("NCHW", "OIHW", "NCHW"),
        precision=lax.Precision.HIGHEST)
    y = y + bias.reshape(1, -1, 1, 1)
    if scale_nc11 is not None:
        y = y * (scale_nc11 + 1.0) + shift_nc11
    return y * jax.nn.sigmoid(y)


if __name__ == "__main__":
    N, C_in, C_out, H, W = 2, 4, 8, 16, 16
    key = jax.random.PRNGKey(0)
    kx_, kw_, kb_, ks1, ks2 = jax.random.split(key, 5)

    x = jax.random.normal(kx_, (N, C_in, H, W), jnp.float32)
    fan_in = C_in * 3 * 3
    weight = jax.random.normal(kw_, (C_out, C_in, 3, 3), jnp.float32) / np.sqrt(fan_in)
    bias = jax.random.normal(kb_, (C_out,), jnp.float32) * 0.1
    scale = jax.random.normal(ks1, (N, C_out, 1, 1), jnp.float32) * 0.1
    shift = jax.random.normal(ks2, (N, C_out, 1, 1), jnp.float32) * 0.1

    # scale_shift path
    out = jax.block_until_ready(block_forward(x, weight, bias, scale, shift))
    ref = _reference(x, weight, bias, scale, shift)
    np.testing.assert_allclose(np.asarray(out), np.asarray(ref), rtol=2e-2, atol=2e-2)

    # scale_shift=None path (conv + bias + SiLU only)
    out2 = jax.block_until_ready(block_forward(x, weight, bias))
    ref2 = _reference(x, weight, bias, None, None)
    np.testing.assert_allclose(np.asarray(out2), np.asarray(ref2), rtol=2e-2, atol=2e-2)

    print("KERNEL_OK")
</pallas_src>

<mosaic_0001>
module attributes {stable_mosaic.version = 11 : i64} {
  func.func @_block_kernel(%arg0: i32, %arg1: i32, %arg2: memref<1x1x8x182xbf16, #tpu.memory_space<vmem>>, %arg3: memref<8x72xbf16, #tpu.memory_space<vmem>>, %arg4: memref<1x2x8x1xf32, #tpu.memory_space<vmem>>, %arg5: memref<1x1x8x144xf32, #tpu.memory_space<vmem>>, %arg6: memref<72x144xbf16, #tpu.memory_space<vmem>>) attributes {dimension_semantics = [#tpu.dimension_semantics<parallel>, #tpu.dimension_semantics<parallel>], iteration_bounds = array<i64: 2, 2>, scalar_prefetch = 0 : i64, scratch_operands = 1 : i64, tpu.core_type = #tpu.core_type<tc>, window_params = [{transform_indices = @transform_0, window_bounds = array<i64: 1, 1, 8, 182>}, {pipeline_mode = #tpu.pipeline_mode<synchronous>, transform_indices = @transform_1, window_bounds = array<i64: 8, 72>}, {transform_indices = @transform_2, window_bounds = array<i64: 1, 2, 8, 1>}, {transform_indices = @transform_3, window_bounds = array<i64: 1, 1, 8, 144>}]} {
    %c0 = arith.constant 0 : index
    %c0_0 = arith.constant 0 : index
    %c0_1 = arith.constant 0 : index
    %c0_2 = arith.constant 0 : index
    %0 = vector.load %arg2[%c0, %c0_0, %c0_1, %c0_2] : memref<1x1x8x182xbf16, #tpu.memory_space<vmem>>, vector<1x1x8x144xbf16>
    %1 = vector.shape_cast %0 : vector<1x1x8x144xbf16> to vector<8x144xbf16>
    %c0_3 = arith.constant 0 : index
    %c0_4 = arith.constant 0 : index
    %2 = vector.load %arg6[%c0_3, %c0_4] : memref<72x144xbf16, #tpu.memory_space<vmem>>, vector<8x144xbf16>
    tpu.vector_store %arg6[%c0_3, %c0_4], %1 {strides = array<i32>} : memref<72x144xbf16, #tpu.memory_space<vmem>>, vector<8x144xbf16>,
    %c0_5 = arith.constant 0 : index
    %c0_6 = arith.constant 0 : index
    %c0_7 = arith.constant 0 : index
    %c1 = arith.constant 1 : index
    %3 = vector.load %arg2[%c0_5, %c0_6, %c0_7, %c1] : memref<1x1x8x182xbf16, #tpu.memory_space<vmem>>, vector<1x1x8x144xbf16>
    %4 = vector.shape_cast %3 : vector<1x1x8x144xbf16> to vector<8x144xbf16>
    %c8 = arith.constant 8 : index
    %c0_8 = arith.constant 0 : index
    %5 = vector.load %arg6[%c8, %c0_8] : memref<72x144xbf16, #tpu.memory_space<vmem>>, vector<8x144xbf16>
    tpu.vector_store %arg6[%c8, %c0_8], %4 {strides = array<i32>} : memref<72x144xbf16, #tpu.memory_space<vmem>>, vector<8x144xbf16>,
    %c0_9 = arith.constant 0 : index
    %c0_10 = arith.constant 0 : index
    %c0_11 = arith.constant 0 : index
    %c2 = arith.constant 2 : index
    %6 = vector.load %arg2[%c0_9, %c0_10, %c0_11, %c2] : memref<1x1x8x182xbf16, #tpu.memory_space<vmem>>, vector<1x1x8x144xbf16>
    %7 = vector.shape_cast %6 : vector<1x1x8x144xbf16> to vector<8x144xbf16>
    %c16 = arith.constant 16 : index
    %c0_12 = arith.constant 0 : index
    %8 = vector.load %arg6[%c16, %c0_12] : memref<72x144xbf16, #tpu.memory_space<vmem>>, vector<8x144xbf16>
    tpu.vector_store %arg6[%c16, %c0_12], %7 {strides = array<i32>} : memref<72x144xbf16, #tpu.memory_space<vmem>>, vector<8x144xbf16>,
    %c0_13 = arith.constant 0 : index
    %c0_14 = arith.constant 0 : index
    %c0_15 = arith.constant 0 : index
    %c18 = arith.constant 18 : index
    %9 = vector.load %arg2[%c0_13, %c0_14, %c0_15, %c18] : memref<1x1x8x182xbf16, #tpu.memory_space<vmem>>, vector<1x1x8x144xbf16>
    %10 = vector.shape_cast %9 : vector<1x1x8x144xbf16> to vector<8x144xbf16>
    %c24 = arith.constant 24 : index
    %c0_16 = arith.constant 0 : index
    %11 = vector.load %arg6[%c24, %c0_16] : memref<72x144xbf16, #tpu.memory_space<vmem>>, vector<8x144xbf16>
    tpu.vector_store %arg6[%c24, %c0_16], %10 {strides = array<i32>} : memref<72x144xbf16, #tpu.memory_space<vmem>>, vector<8x144xbf16>,
    %c0_17 = arith.constant 0 : index
    %c0_18 = arith.constant 0 : index
    %c0_19 = arith.constant 0 : index
    %c19 = arith.constant 19 : index
    %12 = vector.load %arg2[%c0_17, %c0_18, %c0_19, %c19] : memref<1x1x8x182xbf16, #tpu.memory_space<vmem>>, vector<1x1x8x144xbf16>
    %13 = vector.shape_cast %12 : vector<1x1x8x144xbf16> to vector<8x144xbf16>
    %c32 = arith.constant 32 : index
    %c0_20 = arith.constant 0 : index
    %14 = vector.load %arg6[%c32, %c0_20] : memref<72x144xbf16, #tpu.memory_space<vmem>>, vector<8x144xbf16>
    tpu.vector_store %arg6[%c32, %c0_20], %13 {strides = array<i32>} : memref<72x144xbf16, #tpu.memory_space<vmem>>, vector<8x144xbf16>,
    %c0_21 = arith.constant 0 : index
    %c0_22 = arith.constant 0 : index
    %c0_23 = arith.constant 0 : index
    %c20 = arith.constant 20 : index
    %15 = vector.load %arg2[%c0_21, %c0_22, %c0_23, %c20] : memref<1x1x8x182xbf16, #tpu.memory_space<vmem>>, vector<1x1x8x144xbf16>
    %16 = vector.shape_cast %15 : vector<1x1x8x144xbf16> to vector<8x144xbf16>
    %c40 = arith.constant 40 : index
    %c0_24 = arith.constant 0 : index
    %17 = vector.load %arg6[%c40, %c0_24] : memref<72x144xbf16, #tpu.memory_space<vmem>>, vector<8x144xbf16>
    tpu.vector_store %arg6[%c40, %c0_24], %16 {strides = array<i32>} : memref<72x144xbf16, #tpu.memory_space<vmem>>, vector<8x144xbf16>,
    %c0_25 = arith.constant 0 : index
    %c0_26 = arith.constant 0 : index
    %c0_27 = arith.constant 0 : index
    %c36 = arith.constant 36 : index
    %18 = vector.load %arg2[%c0_25, %c0_26, %c0_27, %c36] : memref<1x1x8x182xbf16, #tpu.memory_space<vmem>>, vector<1x1x8x144xbf16>
    %19 = vector.shape_cast %18 : vector<1x1x8x144xbf16> to vector<8x144xbf16>
    %c48 = arith.constant 48 : index
    %c0_28 = arith.constant 0 : index
    %20 = vector.load %arg6[%c48, %c0_28] : memref<72x144xbf16, #tpu.memory_space<vmem>>, vector<8x144xbf16>
    tpu.vector_store %arg6[%c48, %c0_28], %19 {strides = array<i32>} : memref<72x144xbf16, #tpu.memory_space<vmem>>, vector<8x144xbf16>,
    %c0_29 = arith.constant 0 : index
    %c0_30 = arith.constant 0 : index
    %c0_31 = arith.constant 0 : index
    %c37 = arith.constant 37 : index
    %21 = vector.load %arg2[%c0_29, %c0_30, %c0_31, %c37] : memref<1x1x8x182xbf16, #tpu.memory_space<vmem>>, vector<1x1x8x144xbf16>
    %22 = vector.shape_cast %21 : vector<1x1x8x144xbf16> to vector<8x144xbf16>
    %c56 = arith.constant 56 : index
    %c0_32 = arith.constant 0 : index
    %23 = vector.load %arg6[%c56, %c0_32] : memref<72x144xbf16, #tpu.memory_space<vmem>>, vector<8x144xbf16>
    tpu.vector_store %arg6[%c56, %c0_32], %22 {strides = array<i32>} : memref<72x144xbf16, #tpu.memory_space<vmem>>, vector<8x144xbf16>,
    %c0_33 = arith.constant 0 : index
    %c0_34 = arith.constant 0 : index
    %c0_35 = arith.constant 0 : index
    %c38 = arith.constant 38 : index
    %24 = vector.load %arg2[%c0_33, %c0_34, %c0_35, %c38] : memref<1x1x8x182xbf16, #tpu.memory_space<vmem>>, vector<1x1x8x144xbf16>
    %25 = vector.shape_cast %24 : vector<1x1x8x144xbf16> to vector<8x144xbf16>
    %c64 = arith.constant 64 : index
    %c0_36 = arith.constant 0 : index
    %26 = vector.load %arg6[%c64, %c0_36] : memref<72x144xbf16, #tpu.memory_space<vmem>>, vector<8x144xbf16>
    tpu.vector_store %arg6[%c64, %c0_36], %25 {strides = array<i32>} : memref<72x144xbf16, #tpu.memory_space<vmem>>, vector<8x144xbf16>,
    %c0_37 = arith.constant 0 : index
    %c0_38 = arith.constant 0 : index
    %27 = vector.load %arg3[%c0_37, %c0_38] : memref<8x72xbf16, #tpu.memory_space<vmem>>, vector<8x72xbf16>
    %c0_39 = arith.constant 0 : index
    %c0_40 = arith.constant 0 : index
    %28 = vector.load %arg6[%c0_39, %c0_40] : memref<72x144xbf16, #tpu.memory_space<vmem>>, vector<72x144xbf16>
    %cst = arith.constant dense<0.000000e+00> : vector<8x144xf32>
    %29 = tpu.matmul %27, %28, %cst {dimension_numbers = #tpu.dot_dimension_numbers<[1], [0], [0], [1], [0, 0, 1, 1], [], []>} : vector<8x72xbf16>, vector<72x144xbf16>, vector<8x144xf32> -> vector<8x144xf32>
    %c0_41 = arith.constant 0 : index
    %c0_42 = arith.constant 0 : index
    %c0_43 = arith.constant 0 : index
    %c0_44 = arith.constant 0 : index
    %30 = vector.load %arg4[%c0_41, %c0_42, %c0_43, %c0_44] : memref<1x2x8x1xf32, #tpu.memory_space<vmem>>, vector<1x1x8x1xf32>
    %31 = vector.shape_cast %30 : vector<1x1x8x1xf32> to vector<8x1xf32>
    %c0_45 = arith.constant 0 : index
    %c1_46 = arith.constant 1 : index
    %c0_47 = arith.constant 0 : index
    %c0_48 = arith.constant 0 : index
    %32 = vector.load %arg4[%c0_45, %c1_46, %c0_47, %c0_48] : memref<1x2x8x1xf32, #tpu.memory_space<vmem>>, vector<1x1x8x1xf32>
    %33 = vector.shape_cast %32 : vector<1x1x8x1xf32> to vector<8x1xf32>
    %34 = vector.broadcast %31 : vector<8x1xf32> to vector<8x144xf32>
    %35 = arith.mulf %29, %34 : vector<8x144xf32>
    %36 = vector.broadcast %33 : vector<8x1xf32> to vector<8x144xf32>
    %37 = arith.addf %35, %36 : vector<8x144xf32>
    %38 = arith.negf %37 : vector<8x144xf32>
    %39 = math.exp %38 : vector<8x144xf32>
    %cst_49 = arith.constant 1.000000e+00 : f32
    %40 = vector.broadcast %cst_49 : f32 to vector<8x144xf32>
    %41 = arith.addf %40, %39 : vector<8x144xf32>
    %42 = arith.divf %40, %41 : vector<8x144xf32>
    %43 = arith.mulf %37, %42 : vector<8x144xf32>
    %c0_50 = arith.constant 0 : index
    %c0_51 = arith.constant 0 : index
    %c0_52 = arith.constant 0 : index
    %c0_53 = arith.constant 0 : index
    %44 = vector.load %arg5[%c0_50, %c0_51, %c0_52, %c0_53] : memref<1x1x8x144xf32, #tpu.memory_space<vmem>>, vector<1x1x8x144xf32>
    %45 = vector.shape_cast %44 : vector<1x1x8x144xf32> to vector<8x144xf32>
    %46 = vector.shape_cast %43 : vector<8x144xf32> to vector<1x1x8x144xf32>
    tpu.vector_store %arg5[%c0_50, %c0_51, %c0_52, %c0_53], %46 {strides = array<i32>} : memref<1x1x8x144xf32, #tpu.memory_space<vmem>>, vector<1x1x8x144xf32>,
    return
  }
  func.func @transform_0(%arg0: i32, %arg1: i32) -> (i32, i32, i32, i32) {
    %c0_i32 = arith.constant 0 : i32
    %c0_i32_0 = arith.constant 0 : i32
    %c0_i32_1 = arith.constant 0 : i32
    return %arg0, %arg1, %c0_i32, %c0_i32_0 : i32, i32, i32, i32
  }
  func.func @transform_1(%arg0: i32, %arg1: i32) -> (i32, i32) {
    %c0_i32 = arith.constant 0 : i32
    %c0_i32_0 = arith.constant 0 : i32
    %c0_i32_1 = arith.constant 0 : i32
    return %c0_i32, %c0_i32_0 : i32, i32
  }
  func.func @transform_2(%arg0: i32, %arg1: i32) -> (i32, i32, i32, i32) {
    %c0_i32 = arith.constant 0 : i32
    %c0_i32_0 = arith.constant 0 : i32
    %c0_i32_1 = arith.constant 0 : i32
    %c0_i32_2 = arith.constant 0 : i32
    return %arg0, %c0_i32, %c0_i32_0, %c0_i32_1 : i32, i32, i32, i32
  }
  func.func @transform_3(%arg0: i32, %arg1: i32) -> (i32, i32, i32, i32) {
    %c0_i32 = arith.constant 0 : i32
    %c0_i32_0 = arith.constant 0 : i32
    %c0_i32_1 = arith.constant 0 : i32
    return %arg0, %arg1, %c0_i32, %c0_i32_0 : i32, i32, i32, i32
  }
}

</mosaic_0001>

<llo_original>
// kernel: block_forward.1
$region0: #{block_forward.1}
  #allocation0 [shape = 'u32[]', space=smem, size = 0x4, offset = 0x4, fixed_abs, tag = 'smem constant byte address 0x4 - core index']
  #allocation1 [shape = 'u32[144,128]{1,0:T(1,128)}', space=vmem, size = 0x12000, scoped, tag = 'internal scratch']
  #allocation2 [shape = 'bf16[72,144]{1,0:T(8,128)(2,1)}', space=vmem, size = 0x9000, scoped, tag = 'scratch operand']
  %s0 = inlined_call_operand.vmem [shape: bf16[2,2,8,182], index: 0, kind: input, shape index: {}]
  %s1 = inlined_call_operand.vmem [shape: bf16[8,72], index: 1, kind: input, shape index: {}]
  %s2 = inlined_call_operand.vmem [shape: f32[2,2,8,1], index: 2, kind: input, shape index: {}]
  %s3 = inlined_call_operand.vmem [shape: f32[2,2,8,144], index: 3, kind: output, shape index: {}]
  %s4 = sld [smem:[#allocation0]]
  $region45: #{block_forward.1} parent=0
    _
  %s6 = ssub.s32 1, %s4
  %s7 = scalar_select 0, %s6, %s4
  loop: start=0, step=1, limit=6
  $region2: #{block_forward.1} parent=0 // loop_pre_header
    _
  $region3: #{block_forward.1} parent=0 // loop_header
    %s9 = sphi 0, %s13
    %p10 = scmp.ge.s32.totalorder %s9, 6
    %s16 = sphi 0, %s28
    %s17 = sphi 0, %s24
    %s18 = sphi 0, %s16
    %s19 = sphi 0, %s17
    %s20 = sphi 0, %s18
    %s21 = sphi 0, %s19
    %s33 = sphi 0, %s35
    %s36 = sphi 0, %s33
    %s37 = sphi 0, %s36
    %s53 = sphi 0, %s37
    %s57 = sphi 0, %s57
    %s59 = sphi 0, %s57
    %s60 = sphi 0, %s59
    %s74 = sphi 0, %s60
    %s80 = sphi 0, %s82
    %s83 = sphi 0, %s80
    %s84 = sphi 0, %s83
    %s100 = sphi 0, %s84
    %s108 = sphi 0, %s110
    %s111 = sphi 0, %s108
    %s112 = sphi 0, %s111
    %s128 = sphi 0, %s112
  $region4: #{block_forward.1} parent=0 // loop_header_branch
    %12 = sbr.rel (%p10) target = $region8
  $region5: #{block_forward.1} parent=0 // loop_body
    %s14 = ssub.s32 %s9, 1
    %s15 = ssub.s32 %s9, 2
    %s22 = sadd.s32 1, %s17
    %p23 = scmp.ge.s32.totalorder %s22, 2
    %s24 = scalar_select %p23, 0, %s22
    %s25 = sadd.s32 1, %s16
    %s26 = scalar_select %p23, %s25, %s16
    %p27 = scmp.ge.s32.totalorder %s26, 2
    %s28 = scalar_select %p27, 0, %s26
    %s29 = ssub.s32 %s16, %s28
    %s30 = ssub.s32 %s17, %s24
    %s31 = sor.u32 %s29, %s30
    %p32 = scmp.eq.s32.totalorder %s31, 0
    %s34 = sadd.s32 %s33, 1
    %s35 = scalar_select %p32, %s33, %s34
    %p38 = pneg %p32
    %p39 = scmp.eq.s32.totalorder %s9, 3
    %p40 = por %p38, %p39
    %p41 = scmp.ne.s32.totalorder %s33, %s36
    %p42 = scmp.eq.s32.totalorder %s9, 0
    %p43 = por %p41, %p42
    %p44 = scmp.ne.s32.totalorder %s33, %s36
    %p45 = scmp.eq.s32.totalorder %s14, 3
    %p46 = por %p44, %p45
    %p47 = scmp.ne.s32.totalorder %s36, %s37
    %p48 = scmp.eq.s32.totalorder %s14, 0
    %p49 = por %p47, %p48
    %p50 = scmp.ne.s32.totalorder %s36, %s37
    %p51 = scmp.eq.s32.totalorder %s15, 3
    %p52 = por %p50, %p51
    %p54 = scmp.ne.s32.totalorder %s37, %s53
    %p55 = scmp.eq.s32.totalorder %s15, 0
    %p56 = por %p54, %p55
    %s58 = sadd.s32 %s57, 1
    %p61 = scmp.eq.s32.totalorder %s9, 3
    %p62 = scmp.ne.s32.totalorder %s57, %s59
    %p63 = scmp.eq.s32.totalorder %s9, 0
    %p64 = por %p62, %p63
    %p65 = scmp.ne.s32.totalorder %s57, %s59
    %p66 = scmp.eq.s32.totalorder %s14, 3
    %p67 = por %p65, %p66
    %p68 = scmp.ne.s32.totalorder %s59, %s60
    %p69 = scmp.eq.s32.totalorder %s14, 0
    %p70 = por %p68, %p69
    %p71 = scmp.ne.s32.totalorder %s59, %s60
    %p72 = scmp.eq.s32.totalorder %s15, 3
    %p73 = por %p71, %p72
    %p75 = scmp.ne.s32.totalorder %s60, %s74
    %p76 = scmp.eq.s32.totalorder %s15, 0
    %p77 = por %p75, %p76
    %s78 = ssub.s32 %s16, %s28
    %p79 = scmp.eq.s32.totalorder %s78, 0
    %s81 = sadd.s32 %s80, 1
    %s82 = scalar_select %p79, %s80, %s81
    %p85 = pneg %p79
    %p86 = scmp.eq.s32.totalorder %s9, 3
    %p87 = por %p85, %p86
    %p88 = scmp.ne.s32.totalorder %s80, %s83
    %p89 = scmp.eq.s32.totalorder %s9, 0
    %p90 = por %p88, %p89
    %p91 = scmp.ne.s32.totalorder %s80, %s83
    %p92 = scmp.eq.s32.totalorder %s14, 3
    %p93 = por %p91, %p92
    %p94 = scmp.ne.s32.totalorder %s83, %s84
    %p95 = scmp.eq.s32.totalorder %s14, 0
    %p96 = por %p94, %p95
    %p97 = scmp.ne.s32.totalorder %s83, %s84
    %p98 = scmp.eq.s32.totalorder %s15, 3
    %p99 = por %p97, %p98
    %p101 = scmp.ne.s32.totalorder %s84, %s100
    %p102 = scmp.eq.s32.totalorder %s15, 0
    %p103 = por %p101, %p102
    %s104 = ssub.s32 %s16, %s28
    %s105 = ssub.s32 %s17, %s24
    %s106 = sor.u32 %s104, %s105
    %p107 = scmp.eq.s32.totalorder %s106, 0
    %s109 = sadd.s32 %s108, 1
    %s110 = scalar_select %p107, %s108, %s109
    %p113 = pneg %p107
    %p114 = scmp.eq.s32.totalorder %s9, 3
    %p115 = por %p113, %p114
    %p116 = scmp.ne.s32.totalorder %s108, %s111
    %p117 = scmp.eq.s32.totalorder %s9, 0
    %p118 = por %p116, %p117
    %p119 = scmp.ne.s32.totalorder %s108, %s111
    %p120 = scmp.eq.s32.totalorder %s14, 3
    %p121 = por %p119, %p120
    %p122 = scmp.ne.s32.totalorder %s111, %s112
    %p123 = scmp.eq.s32.totalorder %s14, 0
    %p124 = por %p122, %p123
    %p125 = scmp.ne.s32.totalorder %s111, %s112
    %p126 = scmp.eq.s32.totalorder %s15, 3
    %p127 = por %p125, %p126
    %p129 = scmp.ne.s32.totalorder %s112, %s128
    %p130 = scmp.eq.s32.totalorder %s15, 0
    %p131 = por %p129, %p130
    %p132 = scmp.le.s32.totalorder 1, %s9
    %p133 = scmp.lt.s32.totalorder %s9, 5
    %p134 = pnand %p132, %p133
    %p135 = pneg %p134
    // Predicated region
    $region9: #{block_forward.1} parent=5 // pred_check
      _
    $region10: #{block_forward.1} parent=5 // pred_check_branch
      %137 = sbr.rel (%p134) target = $region12
    $region11: #{block_forward.1} parent=5 // pred_region
      %s138 = ssub.s32 %s9, 1
      // Predicated region
      $region13: #{block_forward.1} parent=11 // pred_check
        %p139 = pneg %p70
      $region14: #{block_forward.1} parent=11 // pred_check_branch
        %141 = sbr.rel (%p139) target = $region16
      $region15: #{block_forward.1} parent=11 // pred_region
        _
      $region16: #{block_forward.1} parent=11 // pred_fallthru
        _
    $region12: #{block_forward.1} parent=5 // pred_fallthru
      _
    %p142 = scmp.lt.s32.totalorder %s9, 4
    // Predicated region
    $region17: #{block_forward.1} parent=5 // pred_check
      %p143 = pneg %p142
    $region18: #{block_forward.1} parent=5 // pred_check_branch
      %145 = sbr.rel (%p143) target = $region20
    $region19: #{block_forward.1} parent=5 // pred_region
      // Predicated region
      $region21: #{block_forward.1} parent=19 // pred_check
        %p146 = pneg %p43
      $region22: #{block_forward.1} parent=19 // pred_check_branch
        %148 = sbr.rel (%p146) target = $region24
      $region23: #{block_forward.1} parent=19 // pred_region
        %p149 = scmp.lt.s32.totalorder %s16, 1
        %s150 = scalar_select %p149, %s16, 1
        %p151 = scmp.lt.s32.totalorder %s17, 1
        %s152 = scalar_select %p151, %s17, 1
        %s153 = smul.addr %s152, 2
        %s154 = smul.addr %s150, 4
        %s155 = sadd.s32 %s153, %s154
        %s156 = smul.addr %s155, 4
        %s157 = scalar_lea.vmem %s0, %s156
      $region24: #{block_forward.1} parent=19 // pred_fallthru
        _
      // Predicated region
      $region25: #{block_forward.1} parent=19 // pred_check
        %p158 = pneg %p90
      $region26: #{block_forward.1} parent=19 // pred_check_branch
        %160 = sbr.rel (%p158) target = $region28
      $region27: #{block_forward.1} parent=19 // pred_region
        %p161 = scmp.lt.s32.totalorder %s16, 1
        %s162 = scalar_select %p161, %s16, 1
        %s163 = smul.addr %s162, 2
        %s164 = smul.addr %s163, 8
        %s165 = scalar_lea.vmem %s2, %s164
      $region28: #{block_forward.1} parent=19 // pred_fallthru
        _
    $region20: #{block_forward.1} parent=5 // pred_fallthru
      _
    %p166 = scmp.le.s32.totalorder 1, %s9
    %p167 = scmp.lt.s32.totalorder %s9, 5
    %p168 = pnand %p166, %p167
    %p169 = pneg %p168
    // Predicated region
    $region29: #{block_forward.1} parent=5 // pred_check
      _
    $region30: #{block_forward.1} parent=5 // pred_check_branch
      %171 = sbr.rel (%p168) target = $region32
    $region31: #{block_forward.1} parent=5 // pred_region
      %s172 = ssub.s32 %s9, 1
      %p173 = scmp.lt.s32.totalorder %s18, 1
      %s174 = scalar_select %p173, %s18, 1
      %p175 = scmp.lt.s32.totalorder %s19, 1
      %s176 = scalar_select %p175, %s19, 1
      %s177 = smul.addr %s176, 2
      %s178 = smul.addr %s174, 4
      %s179 = sadd.s32 %s177, %s178
      %s180 = smul.addr %s179, 4
      %s181 = scalar_lea.vmem %s0, %s180
      %p182 = pneg %p49
      %p183 = pneg %p46
      %p184 = pneg %p70
      %p185 = pneg %p67
      %p186 = scmp.lt.s32.totalorder %s18, 1
      %s187 = scalar_select %p186, %s18, 1
      %s188 = smul.addr %s187, 2
      %s189 = smul.addr %s188, 8
      %s190 = scalar_lea.vmem %s2, %s189
      %p191 = pneg %p96
      %p192 = pneg %p93
      %p193 = pneg %p124
      %p194 = pneg %p121
      %p195 = scmp.lt.s32.totalorder %s18, 1
      %s196 = scalar_select %p195, %s18, 1
      %p197 = scmp.lt.s32.totalorder %s19, 1
      %s198 = scalar_select %p197, %s19, 1
      %s199 = smul.addr %s198, 2
      %s200 = smul.addr %s196, 4
      %s201 = sadd.s32 %s199, %s200
      %s202 = smul.addr %s201, 8
      %s203 = scalar_lea.vmem %s3, %s202
      %p204 = scmp.lt.s32.totalorder %s18, 1
      %s205 = scalar_select %p204, %s18, 1
      %p206 = scmp.lt.s32.totalorder %s19, 1
      %s207 = scalar_select %p206, %s19, 1
      %s208 = smul.addr %s207, 2
      %s209 = smul.addr %s205, 4
      %s210 = sadd.s32 %s208, %s209
      %s211 = smul.addr %s210, 4
      %s212 = scalar_lea.vmem %s0, %s211
      %p213 = scmp.lt.s32.totalorder %s18, 1
      %s214 = scalar_select %p213, %s18, 1
      %s215 = smul.addr %s214, 2
      %s216 = smul.addr %s215, 8
      %s217 = scalar_lea.vmem %s2, %s216
      %p218 = scmp.lt.s32.totalorder %s18, 1
      %s219 = scalar_select %p218, %s18, 1
      %p220 = scmp.lt.s32.totalorder %s19, 1
      %s221 = scalar_select %p220, %s19, 1
      %s222 = smul.addr %s221, 2
      %s223 = smul.addr %s219, 4
      %s224 = sadd.s32 %s222, %s223
      %s225 = smul.addr %s224, 8
      %s226 = scalar_lea.vmem %s3, %s225
      %v228 = vld [vmem:[%s212] sm:$0xff]
      %vm229 = vcmask 1043456
      %vm230 = vcmask 130052
      %vm231 = vmor %vm230, %vm229
      %232 = vst.msk [vmem:[#allocation2] sm:$0xff] %vm231, %v228
      %v233 = vld [vmem:[%s212] sm:$0xff]
      %235 = vrot.lane.b32.xlu0 %v233, 127
      %v236 = vpop.permute.xlu0 %235
      %v237 = vrot.slane %v236, 4
      %vm238 = vcmask 1039360
      %v239 = vsel %vm238, %v236, %v237
      %241 = vst.msk [vmem:[#allocation2 + $0x8] sm:$0xff] %vm231, %v239
      %v242 = vld [vmem:[%s212] sm:$0xff]
      %244 = vrot.lane.b32.xlu0 %v242, 126
      %v245 = vpop.permute.xlu0 %244
      %v246 = vrot.slane %v245, 4
      %vm247 = vcmask 1031168
      %v248 = vsel %vm247, %v245, %v246
      %250 = vst.msk [vmem:[#allocation2 + $0x10] sm:$0xff] %vm231, %v248
      %v251 = vld [vmem:[%s212] sm:$0xff]
      %253 = vrot.lane.b32.xlu0 %v251, 110
      %v254 = vpop.permute.xlu0 %253
      %v255 = vrot.slane %v254, 4
      %vm256 = vcmask 900096
      %v257 = vsel %vm256, %v254, %v255
      %259 = vst.msk [vmem:[#allocation2 + $0x18] sm:$0xff] %vm231, %v257
      %v260 = vld [vmem:[%s212] sm:$0xff]
      %262 = vrot.lane.b32.xlu0 %v260, 109
      %v263 = vpop.permute.xlu0 %262
      %v264 = vrot.slane %v263, 4
      %vm265 = vcmask 891904
      %v266 = vsel %vm265, %v263, %v264
      %268 = vst.msk [vmem:[#allocation2 + $0x20] sm:$0xff] %vm231, %v266
      %v269 = vld [vmem:[%s212] sm:$0xff]
      %271 = vrot.lane.b32.xlu0 %v269, 108
      %v272 = vpop.permute.xlu0 %271
      %v273 = vrot.slane %v272, 4
      %vm274 = vcmask 883712
      %v275 = vsel %vm274, %v272, %v273
      %277 = vst.msk [vmem:[#allocation2 + $0x28] sm:$0xff] %vm231, %v275
      %v278 = vld [vmem:[%s212] sm:$0xff]
      %280 = vrot.lane.b32.xlu0 %v278, 92
      %v281 = vpop.permute.xlu0 %280
      %v282 = vrot.slane %v281, 4
      %vm283 = vcmask 752640
      %v284 = vsel %vm283, %v281, %v282
      %286 = vst.msk [vmem:[#allocation2 + $0x30] sm:$0xff] %vm231, %v284
      %v287 = vld [vmem:[%s212] sm:$0xff]
      %289 = vrot.lane.b32.xlu0 %v287, 91
      %v290 = vpop.permute.xlu0 %289
      %v291 = vrot.slane %v290, 4
      %vm292 = vcmask 744448
      %v293 = vsel %vm292, %v290, %v291
      %295 = vst.msk [vmem:[#allocation2 + $0x38] sm:$0xff] %vm231, %v293
      %v296 = vld [vmem:[%s212] sm:$0xff]
      %298 = vrot.lane.b32.xlu0 %v296, 90
      %v299 = vpop.permute.xlu0 %298
      %v300 = vrot.slane %v299, 4
      %vm301 = vcmask 736256
      %v302 = vsel %vm301, %v299, %v300
      %304 = vst.msk [vmem:[#allocation2 + $0x40] sm:$0xff] %vm231, %v302
      %v305 = vld [vmem:[%s1] sm:$0xf]
      %v306 = vld [vmem:[#allocation2] sm:$0xff]
      %v307 = vld [vmem:[#allocation2 + $0x8] sm:$0xff]
      %v308 = vld [vmem:[#allocation2 + $0x10] sm:$0xff]
      %v309 = vld [vmem:[#allocation2 + $0x18] sm:$0xff]
      %v310 = vld [vmem:[#allocation2 + $0x20] sm:$0xff]
      %v311 = vld [vmem:[#allocation2 + $0x28] sm:$0xff]
      %v312 = vld [vmem:[#allocation2 + $0x30] sm:$0xff]
      %v313 = vld [vmem:[#allocation2 + $0x38] sm:$0xff]
      %v314 = vld [vmem:[#allocation2 + $0x40] sm:$0xff]
      %v324 = vunpack.c.l.b16 %v306
      %v325 = vunpack.c.h.b16 %v306
      %v326 = vunpack.c.l.b16 %v307
      %v327 = vunpack.c.h.b16 %v307
      %v328 = vunpack.c.l.b16 %v308
      %v329 = vunpack.c.h.b16 %v308
      %v330 = vunpack.c.l.b16 %v309
      %v331 = vunpack.c.h.b16 %v309
      %v332 = vunpack.c.l.b16 %v310
      %v333 = vunpack.c.h.b16 %v310
      %v334 = vunpack.c.l.b16 %v311
      %v335 = vunpack.c.h.b16 %v311
      %v336 = vunpack.c.l.b16 %v312
      %v337 = vunpack.c.h.b16 %v312
      %v338 = vunpack.c.l.b16 %v313
      %v339 = vunpack.c.h.b16 %v313
      %v340 = vunpack.c.l.b16 %v314
      %v341 = vunpack.c.h.b16 %v314
      %v342 = vpack.c.b16 %v326, %v324
      %v343 = vpack.c.b16 %v327, %v325
      %v344 = vpack.c.b16 %v330, %v328
      %v345 = vpack.c.b16 %v331, %v329
      %v346 = vpack.c.b16 %v334, %v332
      %v347 = vpack.c.b16 %v335, %v333
      %v348 = vpack.c.b16 %v338, %v336
      %v349 = vpack.c.b16 %v339, %v337
      %v350 = vpack.c.b16 %v340, %v340
      %v351 = vpack.c.b16 %v341, %v341
      %vm360 = vcmask 588800
      %v362 = vsel %vm360, %v305, 0
      %v365 = vsel %vm229, %v350, 0
      %v368 = vsel %vm229, %v351, 0
      %370 = vmatprep.subr.bf16.mxu0 %v343
      %371 = vmatpush1.bf16.msra.mxu0 %v342
      %372 = vmatprep.subr.bf16.mxu0 %v345
      %373 = vmatpush1.bf16.msra.mxu0 %v344
      %374 = vmatprep.subr.bf16.mxu0 %v347
      %375 = vmatpush1.bf16.msra.mxu0 %v346
      %376 = vmatprep.subr.bf16.mxu0 %v349
      %377 = vmatpush1.bf16.msra.mxu0 %v348
      %378 = vmatprep.subr.bf16.mxu0 %v368
      %379 = vmatpush1.bf16.msra.mxu0 %v365
      %380 = vmatprep.subr.bf16.mxu0 0
      %381 = vmatpush1.bf16.msra.mxu0 0
      %382 = vmatprep.subr.bf16.mxu0 0
      %383 = vmatpush1.bf16.msra.mxu0 0
      %384 = vmatprep.subr.bf16.mxu0 0
      %385 = vmatpush1.bf16.msra.mxu0 0
      %386 = vmatprep.subr.bf16.mxu0 0
      %387 = vmatpush1.bf16.msra.mxu0 0
      %388 = vmatprep.subr.bf16.mxu0 0
      %389 = vmatpush1.bf16.msra.mxu0 0
      %390 = vmatprep.subr.bf16.mxu0 0
      %391 = vmatpush1.bf16.msra.mxu0 0
      %392 = vmatprep.subr.bf16.mxu0 0
      %393 = vmatpush1.bf16.msra.mxu0 0
      %394 = vmatprep.subr.bf16.mxu0 0
      %395 = vmatpush1.bf16.msra.mxu0 0
      %396 = vmatprep.subr.bf16.mxu0 0
      %397 = vmatpush1.bf16.msra.mxu0 0
      %398 = vmatprep.subr.bf16.mxu0 0
      %399 = vmatpush1.bf16.msra.mxu0 0
      %400 = vmatprep.subr.bf16.mxu0 0
      %401 = vmatpush1.bf16.msra.mxu0 0
      %402 = vmatprep.mubr.bf16.mxu0 0
      %403 = vmatmul.mubr.bf16.gmra.mrb[0].mxu0 %v362
      %v404 = vpop.f32.mrb[0].mxu0
      %v405 = vadd.f32 0.0, %v404
      %v406 = vpop.f32.mrb[0].mxu0
      %v407 = vadd.f32 0.0, %v406
      %v408 = vpop.f32.mrb[0].mxu0
      %v409 = vpop.f32.mrb[0].mxu0
      %410 = vdwg.mxu0
      %v411 = vld [vmem:[%s217] sm:$0xff]
      %s412 = scalar_lea.vmem %s217, 8
      %v413 = vld [vmem:[%s412] sm:$0xff]
      %415 = vset.pattern.permute.xlu0 0
      %416 = vperm.xlu0 %415, %v411
      %v417 = vpop.permute.xlu0 %416
      %v419 = vmul.f32 %v405, %v417
      %v420 = vmul.f32 %v407, %v417
      %422 = vset.pattern.permute.xlu0 0
      %423 = vperm.xlu0 %422, %v413
      %v424 = vpop.permute.xlu0 %423
      %v426 = vadd.f32 %v419, %v424
      %v427 = vadd.f32 %v420, %v424
      %v428 = vxor.u32 %v426, 2147483648
      %v429 = vxor.u32 %v427, 2147483648
      %v430 = vmul.f32 %v428, 1.442695
      %v431 = vpow.pop %v430
      %v432 = vmul.f32 %v429, 1.442695
      %v433 = vpow.pop %v432
      %v434 = vadd.f32 %v431, 1.0
      %v435 = vadd.f32 %v433, 1.0
      %v436 = vrcp.pop %v434
      %v437 = vmul.f32 1.0, %v436
      %v438 = vrcp.pop %v435
      %v439 = vmul.f32 1.0, %v438
      %v440 = vmul.f32 %v426, %v437
      %v441 = vmul.f32 %v427, %v439
      %442 = vst [vmem:[%s226] sm:$0xff] %v440
      %vm443 = vcmask 130048
      %444 = vst.msk [vmem:[%s226 + $0x8] sm:$0xff] %vm443, %v441
      %p445 = scmp.lt.s32.totalorder %s18, 1
      %s446 = scalar_select %p445, %s18, 1
      %p447 = scmp.lt.s32.totalorder %s19, 1
      %s448 = scalar_select %p447, %s19, 1
      %s449 = smul.addr %s448, 2
      %s450 = smul.addr %s446, 4
      %s451 = sadd.s32 %s449, %s450
      %s452 = smul.addr %s451, 8
      %s453 = scalar_lea.vmem %s3, %s452
      // Predicated region
      $region33: #{block_forward.1} parent=31 // pred_check
        %p454 = pneg %p121
      $region34: #{block_forward.1} parent=31 // pred_check_branch
        %456 = sbr.rel (%p454) target = $region36
      $region35: #{block_forward.1} parent=31 // pred_region
        _
      $region36: #{block_forward.1} parent=31 // pred_fallthru
        _
    $region32: #{block_forward.1} parent=5 // pred_fallthru
      _
    %p457 = scmp.le.s32.totalorder 2, %s9
    // Predicated region
    $region37: #{block_forward.1} parent=5 // pred_check
      %p458 = pneg %p457
    $region38: #{block_forward.1} parent=5 // pred_check_branch
      %460 = sbr.rel (%p458) target = $region40
    $region39: #{block_forward.1} parent=5 // pred_region
      %s461 = ssub.s32 %s9, 2
      // Predicated region
      $region41: #{block_forward.1} parent=39 // pred_check
        %p462 = pneg %p127
      $region42: #{block_forward.1} parent=39 // pred_check_branch
        %464 = sbr.rel (%p462) target = $region44
      $region43: #{block_forward.1} parent=39 // pred_region
        %p465 = scmp.lt.s32.totalorder %s20, 1
        %s466 = scalar_select %p465, %s20, 1
        %p467 = scmp.lt.s32.totalorder %s21, 1
        %s468 = scalar_select %p467, %s21, 1
        %s469 = smul.addr %s468, 2
        %s470 = smul.addr %s466, 4
        %s471 = sadd.s32 %s469, %s470
        %s472 = smul.addr %s471, 8
        %s473 = scalar_lea.vmem %s3, %s472
      $region44: #{block_forward.1} parent=39 // pred_fallthru
        _
    $region40: #{block_forward.1} parent=5 // pred_fallthru
      _
  $region6: #{block_forward.1} parent=0 // loop_footer
    %s13 = sadd.s32 1, %s9
  $region7: #{block_forward.1} parent=0 // loop_footer_branch
    %8 = sbr.rel target = $region3
  $region8: #{block_forward.1} parent=0 // loop_exit
    _

</llo_original>
